<compile_context>
chip_gen: v7x
topology: tpu7x:2x2x1
jax: 0.10.0
libtpu: 0.0.40
codegen_flags: <defaults>
</compile_context>

<pallas_src>
import jax
import jax.numpy as jnp
from jax.experimental import pallas as pl
from jax.experimental.pallas import tpu as pltpu


def _round_up(x, m):
    return (x + m - 1) // m * m


def _cdiv(a, b):
    return (a + b - 1) // b


# ---------------------------------------------------------------------------
# Kernel
# ---------------------------------------------------------------------------
def probe_dnn_kernel(x_ref, w1_ref, b1_ref, w2_ref, b2_ref, o_ref):
    """One batch tile: relu(relu(x @ W1 + b1) @ W2 + b2)."""
    # x: (Bm, in_dim) bf16; W1: (in_dim, hid_pad) bf16; b1: (1, hid_pad) f32.
    h = jnp.dot(x_ref[...], w1_ref[...], preferred_element_type=jnp.float32)
    h = jnp.maximum(h + b1_ref[...], 0.0)            # f32 bias + ReLU on VPU
    # Eval-mode dropout == identity (see TODO at top for training mode).
    y = jnp.dot(h.astype(jnp.bfloat16), w2_ref[...],
                preferred_element_type=jnp.float32)
    y = jnp.maximum(y + b2_ref[...], 0.0)            # f32 bias + ReLU
    o_ref[...] = y.astype(o_ref.dtype)


# ---------------------------------------------------------------------------
# One-time parameter preparation (hoisted out of the hot path)
# ---------------------------------------------------------------------------
def prepare_probe_dnn_params(w1, b1, w2, b2):
    """PyTorch layout in: w1 (hid, in), b1 (hid,), w2 (out, hid), b2 (out,).

    Returns weights pre-transposed to (in, out), zero-padded so that the hidden
    and output feature axes are lane-dense (multiples of 128), bf16 weights and
    f32 biases.  Call once at init; reuse across forward calls.
    """
    hid, in_dim = w1.shape
    out_dim = w2.shape[0]
    hid_pad = _round_up(hid, 128)
    out_pad = _round_up(out_dim, 128)

    w1_t = jnp.pad(w1.T.astype(jnp.bfloat16), ((0, 0), (0, hid_pad - hid)))
    b1_r = jnp.pad(b1.astype(jnp.float32), (0, hid_pad - hid)).reshape(1, hid_pad)
    w2_t = jnp.pad(w2.T.astype(jnp.bfloat16),
                   ((0, hid_pad - hid), (0, out_pad - out_dim)))
    b2_r = jnp.pad(b2.astype(jnp.float32), (0, out_pad - out_dim)).reshape(1, out_pad)

    return dict(w1_t=w1_t, b1=b1_r, w2_t=w2_t, b2=b2_r,
                in_dim=in_dim, hid_pad=hid_pad, out_dim=out_dim, out_pad=out_pad)


# ---------------------------------------------------------------------------
# Batch tile policy
# ---------------------------------------------------------------------------
def _batch_tile_policy(B, max_block_m=512):
    """Ceil-split B into ~max_block_m tiles; never pads B up to a full extra
    tile.  Forces >= 2 programs for B >= 32 (both v7x TensorCores get work).
    Tile rounded to 16 rows to match bf16 sublane packing (16 rows / vreg)."""
    num_blocks = _cdiv(B, max_block_m)
    if B >= 32:
        num_blocks = max(2, num_blocks)
    block_m = _round_up(_cdiv(B, num_blocks), 16)
    return num_blocks, block_m, num_blocks * block_m


# ---------------------------------------------------------------------------
# Forward
# ---------------------------------------------------------------------------
def probe_dnn_forward(x, params, *, max_block_m=512, out_dtype=jnp.bfloat16,
                      single_buffer_weights=True):
    """x: (B, in_dim) float.  Returns (B, out_dim) in out_dtype."""
    B, in_dim = x.shape
    assert in_dim == params["in_dim"]
    hid_pad = params["hid_pad"]
    out_dim = params["out_dim"]
    out_pad = params["out_pad"]

    num_blocks, block_m, b_pad = _batch_tile_policy(B, max_block_m)

    # bf16 cast for the MXU; only pad the batch tail when the tile plan does
    # not divide B exactly (no-pad fast path otherwise).
    # TODO(synk): a ragged last block / separate tail call would avoid even
    #             this copy; the tile policy already keeps the waste small
    #             (no round_up(B, block_m) blow-up).
    x_bf = x.astype(jnp.bfloat16)
    if b_pad != B:
        x_bf = jnp.pad(x_bf, ((0, b_pad - B), (0, 0)))

    w1_t, b1_r, w2_t, b2_r = params["w1_t"], params["b1"], params["w2_t"], params["b2"]

    out_itemsize = jnp.dtype(out_dtype).itemsize
    flops = 2 * b_pad * (in_dim * hid_pad + hid_pad * out_pad)
    bytes_accessed = (x_bf.size * 2 + w1_t.size * 2 + w2_t.size * 2
                      + b1_r.size * 4 + b2_r.size * 4
                      + b_pad * out_pad * out_itemsize)
    cost = pl.CostEstimate(flops=flops, transcendentals=0,
                           bytes_accessed=bytes_accessed)

    def run(use_single_buffer):
        kw = ({"pipeline_mode": pl.Buffered(buffer_count=1)}
              if use_single_buffer else {})

        def const_spec(shape):
            # Constant index_map: block never changes, so double buffering only
            # wastes VMEM -> single-buffer when supported.
            return pl.BlockSpec(shape, lambda i: (0, 0), **kw)

        # Rough VMEM budget: double-buffered x/out tiles, (single-buffered)
        # resident weights, plus the f32 intermediate h.
        weight_bytes = (w1_t.size * 2 + w2_t.size * 2
                        + b1_r.size * 4 + b2_r.size * 4)
        est = (2 * block_m * in_dim * 2
               + 2 * block_m * out_pad * out_itemsize
               + (1 if use_single_buffer else 2) * weight_bytes
               + block_m * hid_pad * 4)
        vmem_limit = min(64 * 1024 * 1024,
                         max(32 * 1024 * 1024, int(1.5 * est)))

        return pl.pallas_call(
            probe_dnn_kernel,
            out_shape=jax.ShapeDtypeStruct((b_pad, out_pad), out_dtype),
            grid_spec=pltpu.PrefetchScalarGridSpec(
                num_scalar_prefetch=0,
                grid=(num_blocks,),
                in_specs=[
                    pl.BlockSpec((block_m, in_dim), lambda i: (i, 0)),  # x tile
                    const_spec((in_dim, hid_pad)),                      # W1^T
                    const_spec((1, hid_pad)),                           # b1
                    const_spec((hid_pad, out_pad)),                     # W2^T
                    const_spec((1, out_pad)),                           # b2
                ],
                out_specs=pl.BlockSpec((block_m, out_pad), lambda i: (i, 0)),
            ),
            compiler_params=pltpu.CompilerParams(
                dimension_semantics=("parallel",),
                vmem_limit_bytes=vmem_limit),
            cost_estimate=cost,
        )(x_bf, w1_t, b1_r, w2_t, b2_r)

    if single_buffer_weights:
        try:
            out = run(True)
        except Exception:
            # Fallback: default double buffering if pipeline_mode is unsupported.
            out = run(False)
    else:
        out = run(False)

    return out[:B, :out_dim]


def probe_dnn(x, w1, b1, w2, b2, **kwargs):
    """Convenience one-shot wrapper (prep + forward)."""
    return probe_dnn_forward(x, prepare_probe_dnn_params(w1, b1, w2, b2), **kwargs)


def init_linear(key, in_features, out_features):
    """Deterministic PyTorch-style nn.Linear init."""
    kw, kb = jax.random.split(key)
    bound = 1.0 / (in_features ** 0.5)
    w = jax.random.uniform(kw, (out_features, in_features),
                           minval=-bound, maxval=bound, dtype=jnp.float32)
    b = jax.random.uniform(kb, (out_features,),
                           minval=-bound, maxval=bound, dtype=jnp.float32)
    return w, b


if __name__ == "__main__":
    key = jax.random.PRNGKey(0)
    k_x, k_fc1, k_fc2 = jax.random.split(key, 3)

    # Small shapes implied by the forward; batch=10 deliberately not a multiple
    # of 16 to exercise the padded-tail path.
    batch, in_dim, hid_dim, out_dim = 10, 32, 64, 16

    x = jax.random.normal(k_x, (batch, in_dim), dtype=jnp.float32)
    w1, b1 = init_linear(k_fc1, in_dim, hid_dim)     # fc1: (hid, in), (hid,)
    w2, b2 = init_linear(k_fc2, hid_dim, out_dim)    # fc2: (out, hid), (out,)

    params = prepare_probe_dnn_params(w1, b1, w2, b2)   # one-time layout work
    out = probe_dnn_forward(x, params)
    out = jax.block_until_ready(out)

    # Pure-JAX f32 reference of the forward semantics (eval-mode dropout).
    ref = jnp.maximum(jnp.maximum(x @ w1.T + b1, 0.0) @ w2.T + b2, 0.0)
    assert out.shape == (batch, out_dim)
    out_f32 = out.astype(jnp.float32)
    # bf16 matmul inputs + bf16 output with f32 accumulation -> relaxed tol.
    assert jnp.allclose(out_f32, ref, atol=3e-2, rtol=3e-2), (
        float(jnp.max(jnp.abs(out_f32 - ref))))

    print("KERNEL_OK")
</pallas_src>

<mosaic_0001>
module attributes {stable_mosaic.version = 11 : i64} {
  func.func @probe_dnn_kernel(%arg0: i32, %arg1: memref<16x32xbf16, #tpu.memory_space<vmem>>, %arg2: memref<32x128xbf16, #tpu.memory_space<vmem>>, %arg3: memref<1x128xf32, #tpu.memory_space<vmem>>, %arg4: memref<128x128xbf16, #tpu.memory_space<vmem>>, %arg5: memref<1x128xf32, #tpu.memory_space<vmem>>, %arg6: memref<16x128xbf16, #tpu.memory_space<vmem>>) attributes {dimension_semantics = [#tpu.dimension_semantics<parallel>], iteration_bounds = array<i64: 1>, scalar_prefetch = 0 : i64, scratch_operands = 0 : i64, tpu.core_type = #tpu.core_type<tc>, window_params = [{transform_indices = @transform_0, window_bounds = array<i64: 16, 32>}, {pipeline_mode = #tpu.pipeline_mode<synchronous>, transform_indices = @transform_1, window_bounds = array<i64: 32, 128>}, {pipeline_mode = #tpu.pipeline_mode<synchronous>, transform_indices = @transform_2, window_bounds = array<i64: 1, 128>}, {pipeline_mode = #tpu.pipeline_mode<synchronous>, transform_indices = @transform_3, window_bounds = array<i64: 128, 128>}, {pipeline_mode = #tpu.pipeline_mode<synchronous>, transform_indices = @transform_4, window_bounds = array<i64: 1, 128>}, {transform_indices = @transform_5, window_bounds = array<i64: 16, 128>}]} {
    %c0 = arith.constant 0 : index
    %c0_0 = arith.constant 0 : index
    %0 = vector.load %arg1[%c0, %c0_0] : memref<16x32xbf16, #tpu.memory_space<vmem>>, vector<16x32xbf16>
    %c0_1 = arith.constant 0 : index
    %c0_2 = arith.constant 0 : index
    %1 = vector.load %arg2[%c0_1, %c0_2] : memref<32x128xbf16, #tpu.memory_space<vmem>>, vector<32x128xbf16>
    %cst = arith.constant dense<0.000000e+00> : vector<16x128xf32>
    %2 = tpu.matmul %0, %1, %cst {dimension_numbers = #tpu.dot_dimension_numbers<[1], [0], [0], [1], [0, 0, 1, 1], [], []>} : vector<16x32xbf16>, vector<32x128xbf16>, vector<16x128xf32> -> vector<16x128xf32>
    %c0_3 = arith.constant 0 : index
    %c0_4 = arith.constant 0 : index
    %3 = vector.load %arg3[%c0_3, %c0_4] : memref<1x128xf32, #tpu.memory_space<vmem>>, vector<1x128xf32>
    %4 = vector.broadcast %3 : vector<1x128xf32> to vector<16x128xf32>
    %5 = arith.addf %2, %4 : vector<16x128xf32>
    %cst_5 = arith.constant 0.000000e+00 : f32
    %6 = vector.broadcast %cst_5 : f32 to vector<16x128xf32>
    %7 = arith.maximumf %5, %6 : vector<16x128xf32>
    %8 = arith.truncf %7 : vector<16x128xf32> to vector<16x128xbf16>
    %c0_6 = arith.constant 0 : index
    %c0_7 = arith.constant 0 : index
    %9 = vector.load %arg4[%c0_6, %c0_7] : memref<128x128xbf16, #tpu.memory_space<vmem>>, vector<128x128xbf16>
    %cst_8 = arith.constant dense<0.000000e+00> : vector<16x128xf32>
    %10 = tpu.matmul %8, %9, %cst_8 {dimension_numbers = #tpu.dot_dimension_numbers<[1], [0], [0], [1], [0, 0, 1, 1], [], []>} : vector<16x128xbf16>, vector<128x128xbf16>, vector<16x128xf32> -> vector<16x128xf32>
    %c0_9 = arith.constant 0 : index
    %c0_10 = arith.constant 0 : index
    %11 = vector.load %arg5[%c0_9, %c0_10] : memref<1x128xf32, #tpu.memory_space<vmem>>, vector<1x128xf32>
    %12 = vector.broadcast %11 : vector<1x128xf32> to vector<16x128xf32>
    %13 = arith.addf %10, %12 : vector<16x128xf32>
    %cst_11 = arith.constant 0.000000e+00 : f32
    %14 = vector.broadcast %cst_11 : f32 to vector<16x128xf32>
    %15 = arith.maximumf %13, %14 : vector<16x128xf32>
    %16 = arith.truncf %15 : vector<16x128xf32> to vector<16x128xbf16>
    %c0_12 = arith.constant 0 : index
    %c0_13 = arith.constant 0 : index
    %17 = vector.load %arg6[%c0_12, %c0_13] : memref<16x128xbf16, #tpu.memory_space<vmem>>, vector<16x128xbf16>
    tpu.vector_store %arg6[%c0_12, %c0_13], %16 {strides = array<i32>} : memref<16x128xbf16, #tpu.memory_space<vmem>>, vector<16x128xbf16>,
    return
  }
  func.func @transform_0(%arg0: i32) -> (i32, i32) {
    %c0_i32 = arith.constant 0 : i32
    %c0_i32_0 = arith.constant 0 : i32
    return %arg0, %c0_i32 : i32, i32
  }
  func.func @transform_1(%arg0: i32) -> (i32, i32) {
    %c0_i32 = arith.constant 0 : i32
    %c0_i32_0 = arith.constant 0 : i32
    %c0_i32_1 = arith.constant 0 : i32
    return %c0_i32, %c0_i32_0 : i32, i32
  }
  func.func @transform_2(%arg0: i32) -> (i32, i32) {
    %c0_i32 = arith.constant 0 : i32
    %c0_i32_0 = arith.constant 0 : i32
    %c0_i32_1 = arith.constant 0 : i32
    return %c0_i32, %c0_i32_0 : i32, i32
  }
  func.func @transform_3(%arg0: i32) -> (i32, i32) {
    %c0_i32 = arith.constant 0 : i32
    %c0_i32_0 = arith.constant 0 : i32
    %c0_i32_1 = arith.constant 0 : i32
    return %c0_i32, %c0_i32_0 : i32, i32
  }
  func.func @transform_4(%arg0: i32) -> (i32, i32) {
    %c0_i32 = arith.constant 0 : i32
    %c0_i32_0 = arith.constant 0 : i32
    %c0_i32_1 = arith.constant 0 : i32
    return %c0_i32, %c0_i32_0 : i32, i32
  }
  func.func @transform_5(%arg0: i32) -> (i32, i32) {
    %c0_i32 = arith.constant 0 : i32
    %c0_i32_0 = arith.constant 0 : i32
    return %arg0, %c0_i32 : i32, i32
  }
}

module attributes {stable_mosaic.version = 11 : i64} {
  func.func @probe_dnn_kernel(%arg0: i32, %arg1: memref<16x32xbf16, #tpu.memory_space<vmem>>, %arg2: memref<32x128xbf16, #tpu.memory_space<vmem>>, %arg3: memref<1x128xf32, #tpu.memory_space<vmem>>, %arg4: memref<128x128xbf16, #tpu.memory_space<vmem>>, %arg5: memref<1x128xf32, #tpu.memory_space<vmem>>, %arg6: memref<16x128xbf16, #tpu.memory_space<vmem>>) attributes {dimension_semantics = [#tpu.dimension_semantics<parallel>], iteration_bounds = array<i64: 1>, scalar_prefetch = 0 : i64, scratch_operands = 0 : i64, tpu.core_type = #tpu.core_type<tc>, window_params = [{transform_indices = @transform_0, window_bounds = array<i64: 16, 32>}, {pipeline_mode = #tpu.pipeline_mode<synchronous>, transform_indices = @transform_1, window_bounds = array<i64: 32, 128>}, {pipeline_mode = #tpu.pipeline_mode<synchronous>, transform_indices = @transform_2, window_bounds = array<i64: 1, 128>}, {pipeline_mode = #tpu.pipeline_mode<synchronous>, transform_indices = @transform_3, window_bounds = array<i64: 128, 128>}, {pipeline_mode = #tpu.pipeline_mode<synchronous>, transform_indices = @transform_4, window_bounds = array<i64: 1, 128>}, {transform_indices = @transform_5, window_bounds = array<i64: 16, 128>}]} {
    %c0 = arith.constant 0 : index
    %c0_0 = arith.constant 0 : index
    %0 = vector.load %arg1[%c0, %c0_0] : memref<16x32xbf16, #tpu.memory_space<vmem>>, vector<16x32xbf16>
    %c0_1 = arith.constant 0 : index
    %c0_2 = arith.constant 0 : index
    %1 = vector.load %arg2[%c0_1, %c0_2] : memref<32x128xbf16, #tpu.memory_space<vmem>>, vector<32x128xbf16>
    %cst = arith.constant dense<0.000000e+00> : vector<16x128xf32>
    %2 = tpu.matmul %0, %1, %cst {dimension_numbers = #tpu.dot_dimension_numbers<[1], [0], [0], [1], [0, 0, 1, 1], [], []>} : vector<16x32xbf16>, vector<32x128xbf16>, vector<16x128xf32> -> vector<16x128xf32>
    %c0_3 = arith.constant 0 : index
    %c0_4 = arith.constant 0 : index
    %3 = vector.load %arg3[%c0_3, %c0_4] : memref<1x128xf32, #tpu.memory_space<vmem>>, vector<1x128xf32>
    %4 = vector.broadcast %3 : vector<1x128xf32> to vector<16x128xf32>
    %5 = arith.addf %2, %4 : vector<16x128xf32>
    %cst_5 = arith.constant 0.000000e+00 : f32
    %6 = vector.broadcast %cst_5 : f32 to vector<16x128xf32>
    %7 = arith.maximumf %5, %6 : vector<16x128xf32>
    %8 = arith.truncf %7 : vector<16x128xf32> to vector<16x128xbf16>
    %c0_6 = arith.constant 0 : index
    %c0_7 = arith.constant 0 : index
    %9 = vector.load %arg4[%c0_6, %c0_7] : memref<128x128xbf16, #tpu.memory_space<vmem>>, vector<128x128xbf16>
    %cst_8 = arith.constant dense<0.000000e+00> : vector<16x128xf32>
    %10 = tpu.matmul %8, %9, %cst_8 {dimension_numbers = #tpu.dot_dimension_numbers<[1], [0], [0], [1], [0, 0, 1, 1], [], []>} : vector<16x128xbf16>, vector<128x128xbf16>, vector<16x128xf32> -> vector<16x128xf32>
    %c0_9 = arith.constant 0 : index
    %c0_10 = arith.constant 0 : index
    %11 = vector.load %arg5[%c0_9, %c0_10] : memref<1x128xf32, #tpu.memory_space<vmem>>, vector<1x128xf32>
    %12 = vector.broadcast %11 : vector<1x128xf32> to vector<16x128xf32>
    %13 = arith.addf %10, %12 : vector<16x128xf32>
    %cst_11 = arith.constant 0.000000e+00 : f32
    %14 = vector.broadcast %cst_11 : f32 to vector<16x128xf32>
    %15 = arith.maximumf %13, %14 : vector<16x128xf32>
    %16 = arith.truncf %15 : vector<16x128xf32> to vector<16x128xbf16>
    %c0_12 = arith.constant 0 : index
    %c0_13 = arith.constant 0 : index
    %17 = vector.load %arg6[%c0_12, %c0_13] : memref<16x128xbf16, #tpu.memory_space<vmem>>, vector<16x128xbf16>
    tpu.vector_store %arg6[%c0_12, %c0_13], %16 {strides = array<i32>} : memref<16x128xbf16, #tpu.memory_space<vmem>>, vector<16x128xbf16>,
    return
  }
  func.func @transform_0(%arg0: i32) -> (i32, i32) {
    %c0_i32 = arith.constant 0 : i32
    %c0_i32_0 = arith.constant 0 : i32
    return %arg0, %c0_i32 : i32, i32
  }
  func.func @transform_1(%arg0: i32) -> (i32, i32) {
    %c0_i32 = arith.constant 0 : i32
    %c0_i32_0 = arith.constant 0 : i32
    %c0_i32_1 = arith.constant 0 : i32
    return %c0_i32, %c0_i32_0 : i32, i32
  }
  func.func @transform_2(%arg0: i32) -> (i32, i32) {
    %c0_i32 = arith.constant 0 : i32
    %c0_i32_0 = arith.constant 0 : i32
    %c0_i32_1 = arith.constant 0 : i32
    return %c0_i32, %c0_i32_0 : i32, i32
  }
  func.func @transform_3(%arg0: i32) -> (i32, i32) {
    %c0_i32 = arith.constant 0 : i32
    %c0_i32_0 = arith.constant 0 : i32
    %c0_i32_1 = arith.constant 0 : i32
    return %c0_i32, %c0_i32_0 : i32, i32
  }
  func.func @transform_4(%arg0: i32) -> (i32, i32) {
    %c0_i32 = arith.constant 0 : i32
    %c0_i32_0 = arith.constant 0 : i32
    %c0_i32_1 = arith.constant 0 : i32
    return %c0_i32, %c0_i32_0 : i32, i32
  }
  func.func @transform_5(%arg0: i32) -> (i32, i32) {
    %c0_i32 = arith.constant 0 : i32
    %c0_i32_0 = arith.constant 0 : i32
    return %arg0, %c0_i32 : i32, i32
  }
}

</mosaic_0001>

<llo_original>
// kernel: tpu_custom_call.1
$region0: #{tpu_custom_call.1}
  #allocation0 [shape = 'u32[]', space=smem, size = 0x4, offset = 0x4, fixed_abs, tag = 'smem constant byte address 0x4 - core index']
  #allocation1 [shape = 'u32[144,128]{1,0:T(1,128)}', space=vmem, size = 0x12000, scoped, tag = 'internal scratch']
  %s0 = inlined_call_operand.hbm [shape: bf16[16,32], index: 0, kind: input, shape index: {}]
  %s1 = inlined_call_operand.hbm [shape: bf16[32,128], index: 1, kind: input, shape index: {}]
  %s2 = inlined_call_operand.vmem [shape: f32[1,128], index: 2, kind: input, shape index: {}]
  %s3 = inlined_call_operand.hbm [shape: bf16[128,128], index: 3, kind: input, shape index: {}]
  %s4 = inlined_call_operand.vmem [shape: f32[1,128], index: 4, kind: input, shape index: {}]
  %s5 = inlined_call_operand.hbm [shape: bf16[16,128], index: 5, kind: output, shape index: {}]
  %s6 = sld [smem:[#allocation0]]
  $region42: #{tpu_custom_call.1} parent=0
    _
  %s8 = ssub.s32 1, %s6
  %s9 = scalar_select 0, %s8, %s6
  $region1: #{tpu_custom_call.1} parent=0
    #allocation2 [shape = 'u8[4096]{0}', space=vmem, size = 0x1000, scoped, tag = 'input window, operand 0, single buffered']
    #allocation3 [shape = 's32[1]{0}', space=sflag, size = 0x4, scoped, tag = 'scoped memory for tpu_custom_call.1']
    #allocation4 [shape = 's32[1]{0}', space=sflag, size = 0x4, scoped, tag = 'scoped memory for tpu_custom_call.1']
    #allocation5 [shape = 'u8[8192]{0}', space=vmem, size = 0x2000, scoped, tag = 'input window, operand 1, single buffered']
    #allocation6 [shape = 's32[1]{0}', space=sflag, size = 0x4, scoped, tag = 'scoped memory for tpu_custom_call.1']
    #allocation7 [shape = 'u8[32768]{0}', space=vmem, size = 0x8000, scoped, tag = 'input window, operand 3, single buffered']
    #allocation8 [shape = 'u8[4096]{0}', space=vmem, size = 0x1000, scoped, tag = 'output window, operand 0, single buffered']
    %10 = vsyncpa [#allocation3], 0
    %11 = vsyncpa [#allocation6], 0
    %12 = vsyncpa [#allocation4], 0
    // Predicated region
    $region2: #{tpu_custom_call.1} parent=1 // pred_check
      _
    $region3: #{tpu_custom_call.1} parent=1 // pred_check_branch
      %14 = sbr.rel (0) target = $region5
    $region4: #{tpu_custom_call.1} parent=1 // pred_region
      %s16 = ssub.s32 128, 128
      %17 = vsyncadd [#allocation3], %s16
      %s18 = sshll.u32 [#allocation2], 4
      %s19 = int_to_ptr.vmem [resolvable:$true] %s18
      %24 = dma.hbm_to_vmem [thread:$0]  %s0, 128, %s19, [#allocation3], 64, 64, 4
    $region5: #{tpu_custom_call.1} parent=1 // pred_fallthru
      _
    // Predicated region
    $region6: #{tpu_custom_call.1} parent=1 // pred_check
      _
    $region7: #{tpu_custom_call.1} parent=1 // pred_check_branch
      %26 = sbr.rel (0) target = $region9
    $region8: #{tpu_custom_call.1} parent=1 // pred_region
      %s28 = ssub.s32 256, 256
      %29 = vsyncadd [#allocation6], %s28
      %s30 = sshll.u32 [#allocation5], 4
      %s31 = int_to_ptr.vmem [resolvable:$true] %s30
      %36 = dma.hbm_to_vmem [thread:$0]  %s1, 256, %s31, [#allocation6], 64, 64, 4
    $region9: #{tpu_custom_call.1} parent=1 // pred_fallthru
      _
    // Predicated region
    $region10: #{tpu_custom_call.1} parent=1 // pred_check
      _
    $region11: #{tpu_custom_call.1} parent=1 // pred_check_branch
      %38 = sbr.rel (0) target = $region13
    $region12: #{tpu_custom_call.1} parent=1 // pred_region
      _
    $region13: #{tpu_custom_call.1} parent=1 // pred_fallthru
      _
    // Predicated region
    $region14: #{tpu_custom_call.1} parent=1 // pred_check
      _
    $region15: #{tpu_custom_call.1} parent=1 // pred_check_branch
      %40 = sbr.rel (0) target = $region17
    $region16: #{tpu_custom_call.1} parent=1 // pred_region
      %s42 = ssub.s32 1024, 1024
      %43 = vsyncadd [#allocation6], %s42
      %s44 = sshll.u32 [#allocation7], 4
      %s45 = int_to_ptr.vmem [resolvable:$true] %s44
      %50 = dma.hbm_to_vmem [thread:$0]  %s3, 1024, %s45, [#allocation6], 64, 64, 4
    $region17: #{tpu_custom_call.1} parent=1 // pred_fallthru
      _
    // Predicated region
    $region18: #{tpu_custom_call.1} parent=1 // pred_check
      _
    $region19: #{tpu_custom_call.1} parent=1 // pred_check_branch
      %52 = sbr.rel (0) target = $region21
    $region20: #{tpu_custom_call.1} parent=1 // pred_region
      _
    $region21: #{tpu_custom_call.1} parent=1 // pred_fallthru
      _
    // Predicated region
    $region22: #{tpu_custom_call.1} parent=1 // pred_check
      _
    $region23: #{tpu_custom_call.1} parent=1 // pred_check_branch
      %54 = sbr.rel (0) target = $region25
    $region24: #{tpu_custom_call.1} parent=1 // pred_region
      %55 = dma.done [#allocation3], 128
    $region25: #{tpu_custom_call.1} parent=1 // pred_fallthru
      _
    // Predicated region
    $region26: #{tpu_custom_call.1} parent=1 // pred_check
      _
    $region27: #{tpu_custom_call.1} parent=1 // pred_check_branch
      %57 = sbr.rel (0) target = $region29
    $region28: #{tpu_custom_call.1} parent=1 // pred_region
      %58 = dma.done [#allocation6], 256
    $region29: #{tpu_custom_call.1} parent=1 // pred_fallthru
      _
    // Predicated region
    $region30: #{tpu_custom_call.1} parent=1 // pred_check
      _
    $region31: #{tpu_custom_call.1} parent=1 // pred_check_branch
      %60 = sbr.rel (0) target = $region33
    $region32: #{tpu_custom_call.1} parent=1 // pred_region
      %61 = dma.done [#allocation6], 1024
    $region33: #{tpu_custom_call.1} parent=1 // pred_fallthru
      _
    %v63 = vld [vmem:[#allocation2] sm:$0xf]
    %v64 = vld [vmem:[#allocation2 + $0x4] sm:$0xf]
    %v65 = vld [vmem:[#allocation5] sm:$0xf]
    %v66 = vld [vmem:[#allocation5 + $0x4] sm:$0xf]
    %v67 = vld [vmem:[#allocation5 + $0x8] sm:$0xf]
    %v68 = vld [vmem:[#allocation5 + $0xc] sm:$0xf]
    %v69 = vld [vmem:[%s2] sm:$0x1]
    %v71 = vlaneseq
    %v72 = vshrl.u32 %v71, 7
    %v73 = vsub.s32 0, %v72
    %v74 = vrot.slane %v69, %v73
    %v78 = vunpack.c.l.b16 %v63
    %v79 = vunpack.c.l.b16 %v64
    %v80 = vpack.c.b16 %v79, %v78
    %v85 = vunpack.c.l.b16 %v65
    %v86 = vunpack.c.l.b16 %v66
    %v87 = vunpack.c.l.b16 %v67
    %v88 = vunpack.c.l.b16 %v68
    %v89 = vpack.c.b16 %v86, %v85
    %v90 = vpack.c.b16 %v88, %v87
    %vm93 = vcmask 261120
    %v95 = vsel %vm93, %v80, 0
    %97 = vmatprep.subr.bf16.mxu0 0
    %98 = vmatpush1.bf16.msra.mxu0 %v89
    %99 = vmatprep.subr.bf16.mxu0 0
    %100 = vmatpush1.bf16.msra.mxu0 %v90
    %101 = vmatprep.subr.bf16.mxu0 0
    %102 = vmatpush1.bf16.msra.mxu0 0
    %103 = vmatprep.subr.bf16.mxu0 0
    %104 = vmatpush1.bf16.msra.mxu0 0
    %105 = vmatprep.subr.bf16.mxu0 0
    %106 = vmatpush1.bf16.msra.mxu0 0
    %107 = vmatprep.subr.bf16.mxu0 0
    %108 = vmatpush1.bf16.msra.mxu0 0
    %109 = vmatprep.subr.bf16.mxu0 0
    %110 = vmatpush1.bf16.msra.mxu0 0
    %111 = vmatprep.subr.bf16.mxu0 0
    %112 = vmatpush1.bf16.msra.mxu0 0
    %113 = vmatprep.subr.bf16.mxu0 0
    %114 = vmatpush1.bf16.msra.mxu0 0
    %115 = vmatprep.subr.bf16.mxu0 0
    %116 = vmatpush1.bf16.msra.mxu0 0
    %117 = vmatprep.subr.bf16.mxu0 0
    %118 = vmatpush1.bf16.msra.mxu0 0
    %119 = vmatprep.subr.bf16.mxu0 0
    %120 = vmatpush1.bf16.msra.mxu0 0
    %121 = vmatprep.subr.bf16.mxu0 0
    %122 = vmatpush1.bf16.msra.mxu0 0
    %123 = vmatprep.subr.bf16.mxu0 0
    %124 = vmatpush1.bf16.msra.mxu0 0
    %125 = vmatprep.subr.bf16.mxu0 0
    %126 = vmatpush1.bf16.msra.mxu0 0
    %127 = vmatprep.subr.bf16.mxu0 0
    %128 = vmatpush1.bf16.msra.mxu0 0
    %129 = vmatprep.mubr.bf16.mxu0 0
    %130 = vmatmul.mubr.bf16.gmra.mrb[0].mxu0 %v95
    %v131 = vpop.f32.mrb[0].mxu0
    %v132 = vadd.f32 %v74, %v131
    %v133 = vpop.f32.mrb[0].mxu0
    %v134 = vpop.f32.mrb[0].mxu0
    %v135 = vadd.f32 %v74, %v134
    %v136 = vpop.f32.mrb[0].mxu0
    %137 = vdwg.mxu0
    %v138 = vmax.f32 %v132, 0.0
    %v139 = vmax.f32 %v135, 0.0
    %v140 = vpack.c.bf16 %v139, %v138
    %v141 = vld [vmem:[#allocation7] sm:$0xf]
    %v142 = vld [vmem:[#allocation7 + $0x4] sm:$0xf]
    %v143 = vld [vmem:[#allocation7 + $0x8] sm:$0xf]
    %v144 = vld [vmem:[#allocation7 + $0xc] sm:$0xf]
    %v145 = vld [vmem:[#allocation7 + $0x10] sm:$0xf]
    %v146 = vld [vmem:[#allocation7 + $0x14] sm:$0xf]
    %v147 = vld [vmem:[#allocation7 + $0x18] sm:$0xf]
    %v148 = vld [vmem:[#allocation7 + $0x1c] sm:$0xf]
    %v149 = vld [vmem:[#allocation7 + $0x20] sm:$0xf]
    %v150 = vld [vmem:[#allocation7 + $0x24] sm:$0xf]
    %v151 = vld [vmem:[#allocation7 + $0x28] sm:$0xf]
    %v152 = vld [vmem:[#allocation7 + $0x2c] sm:$0xf]
    %v153 = vld [vmem:[#allocation7 + $0x30] sm:$0xf]
    %v154 = vld [vmem:[#allocation7 + $0x34] sm:$0xf]
    %v155 = vld [vmem:[#allocation7 + $0x38] sm:$0xf]
    %v156 = vld [vmem:[#allocation7 + $0x3c] sm:$0xf]
    %v157 = vld [vmem:[%s4] sm:$0x1]
    %v159 = vlaneseq
    %v160 = vshrl.u32 %v159, 7
    %v161 = vsub.s32 0, %v160
    %v162 = vrot.slane %v157, %v161
    %v180 = vunpack.c.l.b16 %v141
    %v181 = vunpack.c.l.b16 %v142
    %v182 = vunpack.c.l.b16 %v143
    %v183 = vunpack.c.l.b16 %v144
    %v184 = vunpack.c.l.b16 %v145
    %v185 = vunpack.c.l.b16 %v146
    %v186 = vunpack.c.l.b16 %v147
    %v187 = vunpack.c.l.b16 %v148
    %v188 = vunpack.c.l.b16 %v149
    %v189 = vunpack.c.l.b16 %v150
    %v190 = vunpack.c.l.b16 %v151
    %v191 = vunpack.c.l.b16 %v152
    %v192 = vunpack.c.l.b16 %v153
    %v193 = vunpack.c.l.b16 %v154
    %v194 = vunpack.c.l.b16 %v155
    %v195 = vunpack.c.l.b16 %v156
    %v196 = vpack.c.b16 %v181, %v180
    %v197 = vpack.c.b16 %v183, %v182
    %v198 = vpack.c.b16 %v185, %v184
    %v199 = vpack.c.b16 %v187, %v186
    %v200 = vpack.c.b16 %v189, %v188
    %v201 = vpack.c.b16 %v191, %v190
    %v202 = vpack.c.b16 %v193, %v192
    %v203 = vpack.c.b16 %v195, %v194
    %212 = vmatprep.subr.bf16.mxu0 0
    %213 = vmatpush1.bf16.msra.mxu0 %v196
    %214 = vmatprep.subr.bf16.mxu0 0
    %215 = vmatpush1.bf16.msra.mxu0 %v197
    %216 = vmatprep.subr.bf16.mxu0 0
    %217 = vmatpush1.bf16.msra.mxu0 %v198
    %218 = vmatprep.subr.bf16.mxu0 0
    %219 = vmatpush1.bf16.msra.mxu0 %v199
    %220 = vmatprep.subr.bf16.mxu0 0
    %221 = vmatpush1.bf16.msra.mxu0 %v200
    %222 = vmatprep.subr.bf16.mxu0 0
    %223 = vmatpush1.bf16.msra.mxu0 %v201
    %224 = vmatprep.subr.bf16.mxu0 0
    %225 = vmatpush1.bf16.msra.mxu0 %v202
    %226 = vmatprep.subr.bf16.mxu0 0
    %227 = vmatpush1.bf16.msra.mxu0 %v203
    %228 = vmatprep.subr.bf16.mxu0 0
    %229 = vmatpush1.bf16.msra.mxu0 0
    %230 = vmatprep.subr.bf16.mxu0 0
    %231 = vmatpush1.bf16.msra.mxu0 0
    %232 = vmatprep.subr.bf16.mxu0 0
    %233 = vmatpush1.bf16.msra.mxu0 0
    %234 = vmatprep.subr.bf16.mxu0 0
    %235 = vmatpush1.bf16.msra.mxu0 0
    %236 = vmatprep.subr.bf16.mxu0 0
    %237 = vmatpush1.bf16.msra.mxu0 0
    %238 = vmatprep.subr.bf16.mxu0 0
    %239 = vmatpush1.bf16.msra.mxu0 0
    %240 = vmatprep.subr.bf16.mxu0 0
    %241 = vmatpush1.bf16.msra.mxu0 0
    %242 = vmatprep.subr.bf16.mxu0 0
    %243 = vmatpush1.bf16.msra.mxu0 0
    %244 = vmatprep.mubr.bf16.mxu0 0
    %245 = vmatmul.mubr.bf16.gmra.mrb[0].mxu0 %v140
    %v246 = vpop.f32.mrb[0].mxu0
    %v247 = vadd.f32 %v162, %v246
    %v248 = vpop.f32.mrb[0].mxu0
    %v249 = vpop.f32.mrb[0].mxu0
    %v250 = vadd.f32 %v162, %v249
    %v251 = vpop.f32.mrb[0].mxu0
    %252 = vdwg.mxu0
    %v253 = vmax.f32 %v247, 0.0
    %v254 = vmax.f32 %v250, 0.0
    %v255 = vpack.c.bf16 %v254, %v253
    %v257 = vunpack.c.l.b16 %v255
    %v258 = vunpack.c.h.b16 %v255
    %v259 = vpack.c.b16 %v257, %v257
    %v260 = vpack.c.b16 %v258, %v258
    %263 = vst [vmem:[#allocation8] sm:$0xf] %v259
    %264 = vst [vmem:[#allocation8 + $0x4] sm:$0xf] %v260
    // Predicated region
    $region34: #{tpu_custom_call.1} parent=1 // pred_check
      _
    $region35: #{tpu_custom_call.1} parent=1 // pred_check_branch
      %266 = sbr.rel (0) target = $region37
    $region36: #{tpu_custom_call.1} parent=1 // pred_region
      %s268 = ssub.s32 128, 128
      %269 = vsyncadd [#allocation4], %s268
      %s270 = sshll.u32 [#allocation8], 4
      %s271 = int_to_ptr.vmem [resolvable:$true] %s270
      %276 = dma.vmem_to_hbm [thread:$0]  %s271, 128, %s5, [#allocation4], 64, 64, 4
    $region37: #{tpu_custom_call.1} parent=1 // pred_fallthru
      _
    // Predicated region
    $region38: #{tpu_custom_call.1} parent=1 // pred_check
      _
    $region39: #{tpu_custom_call.1} parent=1 // pred_check_branch
      %278 = sbr.rel (0) target = $region41
    $region40: #{tpu_custom_call.1} parent=1 // pred_region
      %279 = dma.done [#allocation4], 128
    $region41: #{tpu_custom_call.1} parent=1 // pred_fallthru
      _
    %280 = vsyncpa [#allocation3], 1
    %281 = vsyncpa [#allocation6], 1
    %282 = vsyncpa [#allocation4], 1

// kernel: tpu_custom_call.1
$region0: #{tpu_custom_call.1}
  #allocation0 [shape = 'u32[]', space=smem, size = 0x4, offset = 0x4, fixed_abs, tag = 'smem constant byte address 0x4 - core index']
  #allocation1 [shape = 'u32[144,128]{1,0:T(1,128)}', space=vmem, size = 0x12000, scoped, tag = 'internal scratch']
  %s0 = inlined_call_operand.hbm [shape: bf16[16,32], index: 0, kind: input, shape index: {}]
  %s1 = inlined_call_operand.hbm [shape: bf16[32,128], index: 1, kind: input, shape index: {}]
  %s2 = inlined_call_operand.vmem [shape: f32[1,128], index: 2, kind: input, shape index: {}]
  %s3 = inlined_call_operand.hbm [shape: bf16[128,128], index: 3, kind: input, shape index: {}]
  %s4 = inlined_call_operand.vmem [shape: f32[1,128], index: 4, kind: input, shape index: {}]
  %s5 = inlined_call_operand.hbm [shape: bf16[16,128], index: 5, kind: output, shape index: {}]
  %s6 = sld [smem:[#allocation0]]
  $region42: #{tpu_custom_call.1} parent=0
    _
  %s8 = ssub.s32 1, %s6
  %s9 = scalar_select 0, %s8, %s6
  $region1: #{tpu_custom_call.1} parent=0
    #allocation2 [shape = 'u8[4096]{0}', space=vmem, size = 0x1000, scoped, tag = 'input window, operand 0, single buffered']
    #allocation3 [shape = 's32[1]{0}', space=sflag, size = 0x4, scoped, tag = 'scoped memory for tpu_custom_call.1']
    #allocation4 [shape = 's32[1]{0}', space=sflag, size = 0x4, scoped, tag = 'scoped memory for tpu_custom_call.1']
    #allocation5 [shape = 'u8[8192]{0}', space=vmem, size = 0x2000, scoped, tag = 'input window, operand 1, single buffered']
    #allocation6 [shape = 's32[1]{0}', space=sflag, size = 0x4, scoped, tag = 'scoped memory for tpu_custom_call.1']
    #allocation7 [shape = 'u8[32768]{0}', space=vmem, size = 0x8000, scoped, tag = 'input window, operand 3, single buffered']
    #allocation8 [shape = 'u8[4096]{0}', space=vmem, size = 0x1000, scoped, tag = 'output window, operand 0, single buffered']
    %10 = vsyncpa [#allocation3], 0
    %11 = vsyncpa [#allocation6], 0
    %12 = vsyncpa [#allocation4], 0
    // Predicated region
    $region2: #{tpu_custom_call.1} parent=1 // pred_check
      _
    $region3: #{tpu_custom_call.1} parent=1 // pred_check_branch
      %14 = sbr.rel (0) target = $region5
    $region4: #{tpu_custom_call.1} parent=1 // pred_region
      %s16 = ssub.s32 128, 128
      %17 = vsyncadd [#allocation3], %s16
      %s18 = sshll.u32 [#allocation2], 4
      %s19 = int_to_ptr.vmem [resolvable:$true] %s18
      %24 = dma.hbm_to_vmem [thread:$0]  %s0, 128, %s19, [#allocation3], 64, 64, 4
    $region5: #{tpu_custom_call.1} parent=1 // pred_fallthru
      _
    // Predicated region
    $region6: #{tpu_custom_call.1} parent=1 // pred_check
      _
    $region7: #{tpu_custom_call.1} parent=1 // pred_check_branch
      %26 = sbr.rel (0) target = $region9
    $region8: #{tpu_custom_call.1} parent=1 // pred_region
      %s28 = ssub.s32 256, 256
      %29 = vsyncadd [#allocation6], %s28
      %s30 = sshll.u32 [#allocation5], 4
      %s31 = int_to_ptr.vmem [resolvable:$true] %s30
      %36 = dma.hbm_to_vmem [thread:$0]  %s1, 256, %s31, [#allocation6], 64, 64, 4
    $region9: #{tpu_custom_call.1} parent=1 // pred_fallthru
      _
    // Predicated region
    $region10: #{tpu_custom_call.1} parent=1 // pred_check
      _
    $region11: #{tpu_custom_call.1} parent=1 // pred_check_branch
      %38 = sbr.rel (0) target = $region13
    $region12: #{tpu_custom_call.1} parent=1 // pred_region
      _
    $region13: #{tpu_custom_call.1} parent=1 // pred_fallthru
      _
    // Predicated region
    $region14: #{tpu_custom_call.1} parent=1 // pred_check
      _
    $region15: #{tpu_custom_call.1} parent=1 // pred_check_branch
      %40 = sbr.rel (0) target = $region17
    $region16: #{tpu_custom_call.1} parent=1 // pred_region
      %s42 = ssub.s32 1024, 1024
      %43 = vsyncadd [#allocation6], %s42
      %s44 = sshll.u32 [#allocation7], 4
      %s45 = int_to_ptr.vmem [resolvable:$true] %s44
      %50 = dma.hbm_to_vmem [thread:$0]  %s3, 1024, %s45, [#allocation6], 64, 64, 4
    $region17: #{tpu_custom_call.1} parent=1 // pred_fallthru
      _
    // Predicated region
    $region18: #{tpu_custom_call.1} parent=1 // pred_check
      _
    $region19: #{tpu_custom_call.1} parent=1 // pred_check_branch
      %52 = sbr.rel (0) target = $region21
    $region20: #{tpu_custom_call.1} parent=1 // pred_region
      _
    $region21: #{tpu_custom_call.1} parent=1 // pred_fallthru
      _
    // Predicated region
    $region22: #{tpu_custom_call.1} parent=1 // pred_check
      _
    $region23: #{tpu_custom_call.1} parent=1 // pred_check_branch
      %54 = sbr.rel (0) target = $region25
    $region24: #{tpu_custom_call.1} parent=1 // pred_region
      %55 = dma.done [#allocation3], 128
    $region25: #{tpu_custom_call.1} parent=1 // pred_fallthru
      _
    // Predicated region
    $region26: #{tpu_custom_call.1} parent=1 // pred_check
      _
    $region27: #{tpu_custom_call.1} parent=1 // pred_check_branch
      %57 = sbr.rel (0) target = $region29
    $region28: #{tpu_custom_call.1} parent=1 // pred_region
      %58 = dma.done [#allocation6], 256
    $region29: #{tpu_custom_call.1} parent=1 // pred_fallthru
      _
    // Predicated region
    $region30: #{tpu_custom_call.1} parent=1 // pred_check
      _
    $region31: #{tpu_custom_call.1} parent=1 // pred_check_branch
      %60 = sbr.rel (0) target = $region33
    $region32: #{tpu_custom_call.1} parent=1 // pred_region
      %61 = dma.done [#allocation6], 1024
    $region33: #{tpu_custom_call.1} parent=1 // pred_fallthru
      _
    %v63 = vld [vmem:[#allocation2] sm:$0xf]
    %v64 = vld [vmem:[#allocation2 + $0x4] sm:$0xf]
    %v65 = vld [vmem:[#allocation5] sm:$0xf]
    %v66 = vld [vmem:[#allocation5 + $0x4] sm:$0xf]
    %v67 = vld [vmem:[#allocation5 + $0x8] sm:$0xf]
    %v68 = vld [vmem:[#allocation5 + $0xc] sm:$0xf]
    %v69 = vld [vmem:[%s2] sm:$0x1]
    %v71 = vlaneseq
    %v72 = vshrl.u32 %v71, 7
    %v73 = vsub.s32 0, %v72
    %v74 = vrot.slane %v69, %v73
    %v78 = vunpack.c.l.b16 %v63
    %v79 = vunpack.c.l.b16 %v64
    %v80 = vpack.c.b16 %v79, %v78
    %v85 = vunpack.c.l.b16 %v65
    %v86 = vunpack.c.l.b16 %v66
    %v87 = vunpack.c.l.b16 %v67
    %v88 = vunpack.c.l.b16 %v68
    %v89 = vpack.c.b16 %v86, %v85
    %v90 = vpack.c.b16 %v88, %v87
    %vm93 = vcmask 261120
    %v95 = vsel %vm93, %v80, 0
    %97 = vmatprep.subr.bf16.mxu0 0
    %98 = vmatpush1.bf16.msra.mxu0 %v89
    %99 = vmatprep.subr.bf16.mxu0 0
    %100 = vmatpush1.bf16.msra.mxu0 %v90
    %101 = vmatprep.subr.bf16.mxu0 0
    %102 = vmatpush1.bf16.msra.mxu0 0
    %103 = vmatprep.subr.bf16.mxu0 0
    %104 = vmatpush1.bf16.msra.mxu0 0
    %105 = vmatprep.subr.bf16.mxu0 0
    %106 = vmatpush1.bf16.msra.mxu0 0
    %107 = vmatprep.subr.bf16.mxu0 0
    %108 = vmatpush1.bf16.msra.mxu0 0
    %109 = vmatprep.subr.bf16.mxu0 0
    %110 = vmatpush1.bf16.msra.mxu0 0
    %111 = vmatprep.subr.bf16.mxu0 0
    %112 = vmatpush1.bf16.msra.mxu0 0
    %113 = vmatprep.subr.bf16.mxu0 0
    %114 = vmatpush1.bf16.msra.mxu0 0
    %115 = vmatprep.subr.bf16.mxu0 0
    %116 = vmatpush1.bf16.msra.mxu0 0
    %117 = vmatprep.subr.bf16.mxu0 0
    %118 = vmatpush1.bf16.msra.mxu0 0
    %119 = vmatprep.subr.bf16.mxu0 0
    %120 = vmatpush1.bf16.msra.mxu0 0
    %121 = vmatprep.subr.bf16.mxu0 0
    %122 = vmatpush1.bf16.msra.mxu0 0
    %123 = vmatprep.subr.bf16.mxu0 0
    %124 = vmatpush1.bf16.msra.mxu0 0
    %125 = vmatprep.subr.bf16.mxu0 0
    %126 = vmatpush1.bf16.msra.mxu0 0
    %127 = vmatprep.subr.bf16.mxu0 0
    %128 = vmatpush1.bf16.msra.mxu0 0
    %129 = vmatprep.mubr.bf16.mxu0 0
    %130 = vmatmul.mubr.bf16.gmra.mrb[0].mxu0 %v95
    %v131 = vpop.f32.mrb[0].mxu0
    %v132 = vadd.f32 %v74, %v131
    %v133 = vpop.f32.mrb[0].mxu0
    %v134 = vpop.f32.mrb[0].mxu0
    %v135 = vadd.f32 %v74, %v134
    %v136 = vpop.f32.mrb[0].mxu0
    %137 = vdwg.mxu0
    %v138 = vmax.f32 %v132, 0.0
    %v139 = vmax.f32 %v135, 0.0
    %v140 = vpack.c.bf16 %v139, %v138
    %v141 = vld [vmem:[#allocation7] sm:$0xf]
    %v142 = vld [vmem:[#allocation7 + $0x4] sm:$0xf]
    %v143 = vld [vmem:[#allocation7 + $0x8] sm:$0xf]
    %v144 = vld [vmem:[#allocation7 + $0xc] sm:$0xf]
    %v145 = vld [vmem:[#allocation7 + $0x10] sm:$0xf]
    %v146 = vld [vmem:[#allocation7 + $0x14] sm:$0xf]
    %v147 = vld [vmem:[#allocation7 + $0x18] sm:$0xf]
    %v148 = vld [vmem:[#allocation7 + $0x1c] sm:$0xf]
    %v149 = vld [vmem:[#allocation7 + $0x20] sm:$0xf]
    %v150 = vld [vmem:[#allocation7 + $0x24] sm:$0xf]
    %v151 = vld [vmem:[#allocation7 + $0x28] sm:$0xf]
    %v152 = vld [vmem:[#allocation7 + $0x2c] sm:$0xf]
    %v153 = vld [vmem:[#allocation7 + $0x30] sm:$0xf]
    %v154 = vld [vmem:[#allocation7 + $0x34] sm:$0xf]
    %v155 = vld [vmem:[#allocation7 + $0x38] sm:$0xf]
    %v156 = vld [vmem:[#allocation7 + $0x3c] sm:$0xf]
    %v157 = vld [vmem:[%s4] sm:$0x1]
    %v159 = vlaneseq
    %v160 = vshrl.u32 %v159, 7
    %v161 = vsub.s32 0, %v160
    %v162 = vrot.slane %v157, %v161
    %v180 = vunpack.c.l.b16 %v141
    %v181 = vunpack.c.l.b16 %v142
    %v182 = vunpack.c.l.b16 %v143
    %v183 = vunpack.c.l.b16 %v144
    %v184 = vunpack.c.l.b16 %v145
    %v185 = vunpack.c.l.b16 %v146
    %v186 = vunpack.c.l.b16 %v147
    %v187 = vunpack.c.l.b16 %v148
    %v188 = vunpack.c.l.b16 %v149
    %v189 = vunpack.c.l.b16 %v150
    %v190 = vunpack.c.l.b16 %v151
    %v191 = vunpack.c.l.b16 %v152
    %v192 = vunpack.c.l.b16 %v153
    %v193 = vunpack.c.l.b16 %v154
    %v194 = vunpack.c.l.b16 %v155
    %v195 = vunpack.c.l.b16 %v156
    %v196 = vpack.c.b16 %v181, %v180
    %v197 = vpack.c.b16 %v183, %v182
    %v198 = vpack.c.b16 %v185, %v184
    %v199 = vpack.c.b16 %v187, %v186
    %v200 = vpack.c.b16 %v189, %v188
    %v201 = vpack.c.b16 %v191, %v190
    %v202 = vpack.c.b16 %v193, %v192
    %v203 = vpack.c.b16 %v195, %v194
    %212 = vmatprep.subr.bf16.mxu0 0
    %213 = vmatpush1.bf16.msra.mxu0 %v196
    %214 = vmatprep.subr.bf16.mxu0 0
    %215 = vmatpush1.bf16.msra.mxu0 %v197
    %216 = vmatprep.subr.bf16.mxu0 0
    %217 = vmatpush1.bf16.msra.mxu0 %v198
    %218 = vmatprep.subr.bf16.mxu0 0
    %219 = vmatpush1.bf16.msra.mxu0 %v199
    %220 = vmatprep.subr.bf16.mxu0 0
    %221 = vmatpush1.bf16.msra.mxu0 %v200
    %222 = vmatprep.subr.bf16.mxu0 0
    %223 = vmatpush1.bf16.msra.mxu0 %v201
    %224 = vmatprep.subr.bf16.mxu0 0
    %225 = vmatpush1.bf16.msra.mxu0 %v202
    %226 = vmatprep.subr.bf16.mxu0 0
    %227 = vmatpush1.bf16.msra.mxu0 %v203
    %228 = vmatprep.subr.bf16.mxu0 0
    %229 = vmatpush1.bf16.msra.mxu0 0
    %230 = vmatprep.subr.bf16.mxu0 0
    %231 = vmatpush1.bf16.msra.mxu0 0
    %232 = vmatprep.subr.bf16.mxu0 0
    %233 = vmatpush1.bf16.msra.mxu0 0
    %234 = vmatprep.subr.bf16.mxu0 0
    %235 = vmatpush1.bf16.msra.mxu0 0
    %236 = vmatprep.subr.bf16.mxu0 0
    %237 = vmatpush1.bf16.msra.mxu0 0
    %238 = vmatprep.subr.bf16.mxu0 0
    %239 = vmatpush1.bf16.msra.mxu0 0
    %240 = vmatprep.subr.bf16.mxu0 0
    %241 = vmatpush1.bf16.msra.mxu0 0
    %242 = vmatprep.subr.bf16.mxu0 0
    %243 = vmatpush1.bf16.msra.mxu0 0
    %244 = vmatprep.mubr.bf16.mxu0 0
    %245 = vmatmul.mubr.bf16.gmra.mrb[0].mxu0 %v140
    %v246 = vpop.f32.mrb[0].mxu0
    %v247 = vadd.f32 %v162, %v246
    %v248 = vpop.f32.mrb[0].mxu0
    %v249 = vpop.f32.mrb[0].mxu0
    %v250 = vadd.f32 %v162, %v249
    %v251 = vpop.f32.mrb[0].mxu0
    %252 = vdwg.mxu0
    %v253 = vmax.f32 %v247, 0.0
    %v254 = vmax.f32 %v250, 0.0
    %v255 = vpack.c.bf16 %v254, %v253
    %v257 = vunpack.c.l.b16 %v255
    %v258 = vunpack.c.h.b16 %v255
    %v259 = vpack.c.b16 %v257, %v257
    %v260 = vpack.c.b16 %v258, %v258
    %263 = vst [vmem:[#allocation8] sm:$0xf] %v259
    %264 = vst [vmem:[#allocation8 + $0x4] sm:$0xf] %v260
    // Predicated region
    $region34: #{tpu_custom_call.1} parent=1 // pred_check
      _
    $region35: #{tpu_custom_call.1} parent=1 // pred_check_branch
      %266 = sbr.rel (0) target = $region37
    $region36: #{tpu_custom_call.1} parent=1 // pred_region
      %s268 = ssub.s32 128, 128
      %269 = vsyncadd [#allocation4], %s268
      %s270 = sshll.u32 [#allocation8], 4
      %s271 = int_to_ptr.vmem [resolvable:$true] %s270
      %276 = dma.vmem_to_hbm [thread:$0]  %s271, 128, %s5, [#allocation4], 64, 64, 4
    $region37: #{tpu_custom_call.1} parent=1 // pred_fallthru
      _
    // Predicated region
    $region38: #{tpu_custom_call.1} parent=1 // pred_check
      _
    $region39: #{tpu_custom_call.1} parent=1 // pred_check_branch
      %278 = sbr.rel (0) target = $region41
    $region40: #{tpu_custom_call.1} parent=1 // pred_region
      %279 = dma.done [#allocation4], 128
    $region41: #{tpu_custom_call.1} parent=1 // pred_fallthru
      _
    %280 = vsyncpa [#allocation3], 1
    %281 = vsyncpa [#allocation6], 1
    %282 = vsyncpa [#allocation4], 1

</llo_original>
